<compile_context>
chip_gen: v5e
topology: v5e:2x2
jax: 0.10.0
libtpu: 0.0.40
codegen_flags: <defaults>
</compile_context>

<pallas_src>
import jax
import jax.numpy as jnp
from jax.experimental import pallas as pl
from jax.experimental.pallas import tpu as pltpu

HIDDEN = 32             # hidden_size of the PyTorch module
NUM_DNN = 2             # number of stacked DNN blocks
LN_EPS = 1e-5           # nn.LayerNorm default eps
PACK = 128 // HIDDEN    # original rows packed per 128-lane row (= 4)
WLANE = PACK * HIDDEN   # = 128


def res_dnn_kernel(x_ref, whi_ref, wlo_ref, b_ref, g_ref, be_ref, gf_ref, bf_ref,
                   a_ref, o_ref):
    # x_ref  : (T, 128)              4 original rows packed per 128-lane row
    # whi_ref: (NUM_DNN, 128, 128)   bf16 hi part of block-diag kron(I4, W_i), (in,out)
    # wlo_ref: (NUM_DNN, 128, 128)   bf16 lo residual of the same
    # b_ref  : (NUM_DNN, 128)        bias, tiled x4 along lanes (f32)
    # g_ref  : (NUM_DNN, 128)        per-layer LN gamma, tiled x4 (f32)
    # be_ref : (NUM_DNN, 128)        per-layer LN beta,  tiled x4 (f32)
    # gf_ref : (1, 128)              final LN gamma, tiled x4 (f32)
    # bf_ref : (1, 128)              final LN beta,  tiled x4 (f32)
    # a_ref  : (128, 128)            bf16 kron(I4, ones(32,32)/32): group-mean matrix
    # o_ref  : (T, 128)
    x = x_ref[...].astype(jnp.float32)
    A = a_ref[...]                                  # bf16; entries 1/32 are exact in bf16

    def split(v):
        # Compensated bf16 split: v ~= hi + lo with both operands truly bf16-typed so
        # Mosaic emits single-pass bf16 MXU matmuls (no multi-pass f32 emulation).
        hi = v.astype(jnp.bfloat16)
        lo = (v - hi.astype(jnp.float32)).astype(jnp.bfloat16)
        return hi, lo

    def group_mean(v):
        # Mean over each 32-lane group (one original row), broadcast back over the
        # group, on the MXU.  hi+lo keeps ~f32 accuracy (~4e-6 relative).
        hi, lo = split(v)
        return (jnp.dot(hi, A, preferred_element_type=jnp.float32)
                + jnp.dot(lo, A, preferred_element_type=jnp.float32))

    def group_layer_norm(v, gamma, beta):
        mu = group_mean(v)
        c = v - mu                                   # c reused between mean and variance
        var = group_mean(c * c)                      # biased variance (matches nn.LayerNorm)
        return c * jax.lax.rsqrt(var + LN_EPS) * gamma + beta

    h = x
    for i in range(NUM_DNN):                         # small static constant -> unrolled
        h_hi, h_lo = split(h)
        # x @ W with bf16 hi/lo on both operands; lo@lo dropped (~2^-18 relative).
        y = (jnp.dot(h_hi, whi_ref[i], preferred_element_type=jnp.float32)
             + jnp.dot(h_hi, wlo_ref[i], preferred_element_type=jnp.float32)
             + jnp.dot(h_lo, whi_ref[i], preferred_element_type=jnp.float32)
             + b_ref[i:i + 1, :])
        # nn.Dropout is identity in eval mode.
        # TODO(synk): training-mode dropout (random masking) intentionally omitted.
        y = jnp.tanh(y)
        h = group_layer_norm(y, g_ref[i:i + 1, :], be_ref[i:i + 1, :])
    h = jnp.tanh(x + h)                              # residual shortcut + activation
    o_ref[...] = group_layer_norm(h, gf_ref[...], bf_ref[...]).astype(o_ref.dtype)


def res_dnn_forward(x, w, b, g, be, gf, bf, *, tile_rows=2048):
    """x: (M, HIDDEN) -> (M, HIDDEN).  w: (NUM_DNN, HIDDEN, HIDDEN) in (in, out) layout."""
    M, H = x.shape
    assert H == HIDDEN and w.shape == (NUM_DNN, H, H)
    P, W = PACK, WLANE

    # ---- pack parameters lane-dense (tiny, outside the kernel) --------------
    eye = jnp.eye(P, dtype=jnp.float32)
    wblk = jnp.einsum("pq,nab->npaqb", eye, w.astype(jnp.float32)).reshape(NUM_DNN, W, W)
    w_hi = wblk.astype(jnp.bfloat16)                                 # bf16 hi part
    w_lo = (wblk - w_hi.astype(jnp.float32)).astype(jnp.bfloat16)    # bf16 lo residual
    ablk = jnp.kron(eye, jnp.full((H, H), 1.0 / H, jnp.float32)).astype(jnp.bfloat16)
    bblk = jnp.tile(b.astype(jnp.float32), (1, P))
    gblk = jnp.tile(g.astype(jnp.float32), (1, P))
    beblk = jnp.tile(be.astype(jnp.float32), (1, P))
    gfblk = jnp.tile(gf.astype(jnp.float32), (1, P))
    bfblk = jnp.tile(bf.astype(jnp.float32), (1, P))

    # ---- pack activations: 4 consecutive rows -> one 128-lane row -----------
    # Pad only to a multiple of PACK (rare, <= 3 rows); no tile-multiple padding.
    m_pad = ((M + P - 1) // P) * P
    xp = x if m_pad == M else jnp.pad(x, ((0, m_pad - M), (0, 0)))
    rows = m_pad // P
    xp = xp.reshape(rows, W)                          # free row-major reinterpretation

    # ---- tile size: lane-dense (tr, 128), 8-sublane aligned ------------------
    tr = min(tile_rows, ((rows + 7) // 8) * 8)
    grid_m = pl.cdiv(rows, tr)                        # partial last block handled by Pallas
    if grid_m > 1 and grid_m % 2 == 1:
        # Best-effort v7x megacore balance: prefer an even number of blocks.
        target = grid_m + 1
        tr = max(8, ((pl.cdiv(rows, target) + 7) // 8) * 8)
        grid_m = pl.cdiv(rows, tr)

    const2 = lambda i: (0, 0)
    const3 = lambda i: (0, 0, 0)

    out = pl.pallas_call(
        res_dnn_kernel,
        out_shape=jax.ShapeDtypeStruct((rows, W), x.dtype),
        grid=(grid_m,),
        in_specs=[
            pl.BlockSpec((tr, W), lambda i: (i, 0)),      # packed activations (pipelined)
            pl.BlockSpec((NUM_DNN, W, W), const3),        # W hi (resident, bf16)
            pl.BlockSpec((NUM_DNN, W, W), const3),        # W lo (resident, bf16)
            pl.BlockSpec((NUM_DNN, W), const2),           # bias
            pl.BlockSpec((NUM_DNN, W), const2),           # per-layer LN gamma
            pl.BlockSpec((NUM_DNN, W), const2),           # per-layer LN beta
            pl.BlockSpec((1, W), const2),                 # final LN gamma
            pl.BlockSpec((1, W), const2),                 # final LN beta
            pl.BlockSpec((W, W), const2),                 # group-mean matrix (bf16)
        ],
        out_specs=pl.BlockSpec((tr, W), lambda i: (i, 0)),
        compiler_params=pltpu.CompilerParams(
            dimension_semantics=("parallel",),            # megacore sharding on v7x
        ),
    )(xp, w_hi, w_lo, bblk, gblk, beblk, gfblk, bfblk, ablk)

    out = out.reshape(m_pad, H)
    return out if m_pad == M else out[:M]


res_dnn = jax.jit(res_dnn_forward, static_argnames=("tile_rows",))


def init_params(key, hidden, num_dnn):
    # Deterministic synthetic init (PyTorch Linear-style uniform bounds).
    bound = 1.0 / jnp.sqrt(hidden)
    kw, kb = jax.random.split(key)
    # stored as (in, out) so the kernel does x @ W (== PyTorch x @ W.T)
    w = jax.random.uniform(kw, (num_dnn, hidden, hidden), jnp.float32, -bound, bound)
    b = jax.random.uniform(kb, (num_dnn, hidden), jnp.float32, -bound, bound)
    g = jnp.ones((num_dnn, hidden), jnp.float32)      # per-layer LN gamma
    be = jnp.zeros((num_dnn, hidden), jnp.float32)    # per-layer LN beta
    gf = jnp.ones((1, hidden), jnp.float32)           # final LN gamma
    bf = jnp.zeros((1, hidden), jnp.float32)          # final LN beta
    return w, b, g, be, gf, bf


if __name__ == "__main__":
    key = jax.random.PRNGKey(0)
    k_x, k_x2, k_x3, k_p = jax.random.split(key, 4)

    batch, seq, hidden = 2, 8, HIDDEN
    w, b, g, be, gf, bf = init_params(k_p, hidden, NUM_DNN)

    # Pure-JAX reference (mirrors the PyTorch forward in eval mode).
    def ref(x2d):
        h = x2d
        for i in range(NUM_DNN):
            y = h @ w[i] + b[i]
            y = jnp.tanh(y)
            m = y.mean(-1, keepdims=True)
            v = ((y - m) ** 2).mean(-1, keepdims=True)
            h = (y - m) / jnp.sqrt(v + LN_EPS) * g[i] + be[i]
        h = jnp.tanh(x2d + h)
        m = h.mean(-1, keepdims=True)
        v = ((h - m) ** 2).mean(-1, keepdims=True)
        return (h - m) / jnp.sqrt(v + LN_EPS) * gf + bf

    # Tolerance: 2e-4 absorbs the ~4e-6-relative compensated-bf16 matmul noise plus
    # MXU summation-order differences; any real bug would be orders of magnitude larger.
    TOL = dict(atol=2e-4, rtol=2e-4)

    # --- small demo shape (batch=2, seq=8, hidden=32) ------------------------
    x = jax.random.normal(k_x, (batch, seq, hidden), jnp.float32)
    x2d = x.reshape(batch * seq, hidden)        # Linear/LayerNorm act on last axis only
    out = res_dnn(x2d, w, b, g, be, gf, bf)
    jax.block_until_ready(out)
    assert out.shape == x2d.shape
    assert jnp.allclose(out, ref(x2d), **TOL)
    out = out.reshape(batch, seq, hidden)

    # --- larger shape: single large tile, partial edge block (1250 rows < tr) -
    x_big = jax.random.normal(k_x2, (5000, hidden), jnp.float32)
    out_big = res_dnn(x_big, w, b, g, be, gf, bf)
    jax.block_until_ready(out_big)
    assert out_big.shape == x_big.shape
    assert jnp.allclose(out_big, ref(x_big), **TOL)

    # --- ragged shape with small tiles: PACK padding + multi-tile grid with a
    # partial last block + even-grid balancing all exercised ------------------
    x_rag = jax.random.normal(k_x3, (5001, hidden), jnp.float32)   # not a multiple of 4
    out_rag = res_dnn(x_rag, w, b, g, be, gf, bf, tile_rows=256)
    jax.block_until_ready(out_rag)
    assert out_rag.shape == x_rag.shape
    assert jnp.allclose(out_rag, ref(x_rag), **TOL)

    print("KERNEL_OK")
</pallas_src>

<mosaic_0001>
module attributes {stable_mosaic.version = 11 : i64} {
  func.func @res_dnn_kernel(%arg0: i32, %arg1: memref<8x128xf32, #tpu.memory_space<vmem>>, %arg2: memref<2x128x128xbf16, #tpu.memory_space<vmem>>, %arg3: memref<2x128x128xbf16, #tpu.memory_space<vmem>>, %arg4: memref<2x128xf32, #tpu.memory_space<vmem>>, %arg5: memref<2x128xf32, #tpu.memory_space<vmem>>, %arg6: memref<2x128xf32, #tpu.memory_space<vmem>>, %arg7: memref<1x128xf32, #tpu.memory_space<vmem>>, %arg8: memref<1x128xf32, #tpu.memory_space<vmem>>, %arg9: memref<128x128xbf16, #tpu.memory_space<vmem>>, %arg10: memref<8x128xf32, #tpu.memory_space<vmem>>) attributes {dimension_semantics = [#tpu.dimension_semantics<parallel>], iteration_bounds = array<i64: 1>, scalar_prefetch = 0 : i64, scratch_operands = 0 : i64, tpu.core_type = #tpu.core_type<tc>, window_params = [{transform_indices = @transform_0, window_bounds = array<i64: 8, 128>}, {pipeline_mode = #tpu.pipeline_mode<synchronous>, transform_indices = @transform_1, window_bounds = array<i64: 2, 128, 128>}, {pipeline_mode = #tpu.pipeline_mode<synchronous>, transform_indices = @transform_2, window_bounds = array<i64: 2, 128, 128>}, {pipeline_mode = #tpu.pipeline_mode<synchronous>, transform_indices = @transform_3, window_bounds = array<i64: 2, 128>}, {pipeline_mode = #tpu.pipeline_mode<synchronous>, transform_indices = @transform_4, window_bounds = array<i64: 2, 128>}, {pipeline_mode = #tpu.pipeline_mode<synchronous>, transform_indices = @transform_5, window_bounds = array<i64: 2, 128>}, {pipeline_mode = #tpu.pipeline_mode<synchronous>, transform_indices = @transform_6, window_bounds = array<i64: 1, 128>}, {pipeline_mode = #tpu.pipeline_mode<synchronous>, transform_indices = @transform_7, window_bounds = array<i64: 1, 128>}, {pipeline_mode = #tpu.pipeline_mode<synchronous>, transform_indices = @transform_8, window_bounds = array<i64: 128, 128>}, {transform_indices = @transform_9, window_bounds = array<i64: 8, 128>}]} {
    %c0 = arith.constant 0 : index
    %c0_0 = arith.constant 0 : index
    %0 = vector.load %arg1[%c0, %c0_0] : memref<8x128xf32, #tpu.memory_space<vmem>>, vector<8x128xf32>
    %c0_1 = arith.constant 0 : index
    %c0_2 = arith.constant 0 : index
    %1 = vector.load %arg9[%c0_1, %c0_2] : memref<128x128xbf16, #tpu.memory_space<vmem>>, vector<128x128xbf16>
    %2 = arith.truncf %0 : vector<8x128xf32> to vector<8x128xbf16>
    %3 = arith.extf %2 : vector<8x128xbf16> to vector<8x128xf32>
    %4 = arith.subf %0, %3 : vector<8x128xf32>
    %5 = arith.truncf %4 : vector<8x128xf32> to vector<8x128xbf16>
    %c0_3 = arith.constant 0 : index
    %c0_4 = arith.constant 0 : index
    %c0_5 = arith.constant 0 : index
    %6 = vector.load %arg2[%c0_3, %c0_4, %c0_5] : memref<2x128x128xbf16, #tpu.memory_space<vmem>>, vector<1x128x128xbf16>
    %7 = vector.shape_cast %6 : vector<1x128x128xbf16> to vector<128x128xbf16>
    %cst = arith.constant dense<0.000000e+00> : vector<8x128xf32>
    %8 = tpu.matmul %2, %7, %cst {dimension_numbers = #tpu.dot_dimension_numbers<[1], [0], [0], [1], [0, 0, 1, 1], [], []>} : vector<8x128xbf16>, vector<128x128xbf16>, vector<8x128xf32> -> vector<8x128xf32>
    %c0_6 = arith.constant 0 : index
    %c0_7 = arith.constant 0 : index
    %c0_8 = arith.constant 0 : index
    %9 = vector.load %arg3[%c0_6, %c0_7, %c0_8] : memref<2x128x128xbf16, #tpu.memory_space<vmem>>, vector<1x128x128xbf16>
    %10 = vector.shape_cast %9 : vector<1x128x128xbf16> to vector<128x128xbf16>
    %cst_9 = arith.constant dense<0.000000e+00> : vector<8x128xf32>
    %11 = tpu.matmul %2, %10, %cst_9 {dimension_numbers = #tpu.dot_dimension_numbers<[1], [0], [0], [1], [0, 0, 1, 1], [], []>} : vector<8x128xbf16>, vector<128x128xbf16>, vector<8x128xf32> -> vector<8x128xf32>
    %12 = arith.addf %8, %11 : vector<8x128xf32>
    %c0_10 = arith.constant 0 : index
    %c0_11 = arith.constant 0 : index
    %c0_12 = arith.constant 0 : index
    %13 = vector.load %arg2[%c0_10, %c0_11, %c0_12] : memref<2x128x128xbf16, #tpu.memory_space<vmem>>, vector<1x128x128xbf16>
    %14 = vector.shape_cast %13 : vector<1x128x128xbf16> to vector<128x128xbf16>
    %cst_13 = arith.constant dense<0.000000e+00> : vector<8x128xf32>
    %15 = tpu.matmul %5, %14, %cst_13 {dimension_numbers = #tpu.dot_dimension_numbers<[1], [0], [0], [1], [0, 0, 1, 1], [], []>} : vector<8x128xbf16>, vector<128x128xbf16>, vector<8x128xf32> -> vector<8x128xf32>
    %16 = arith.addf %12, %15 : vector<8x128xf32>
    %c0_14 = arith.constant 0 : index
    %c0_15 = arith.constant 0 : index
    %17 = vector.load %arg4[%c0_14, %c0_15] : memref<2x128xf32, #tpu.memory_space<vmem>>, vector<1x128xf32>
    %18 = vector.broadcast %17 : vector<1x128xf32> to vector<8x128xf32>
    %19 = arith.addf %16, %18 : vector<8x128xf32>
    %20 = math.tanh %19 : vector<8x128xf32>
    %c0_16 = arith.constant 0 : index
    %c0_17 = arith.constant 0 : index
    %21 = vector.load %arg5[%c0_16, %c0_17] : memref<2x128xf32, #tpu.memory_space<vmem>>, vector<1x128xf32>
    %c0_18 = arith.constant 0 : index
    %c0_19 = arith.constant 0 : index
    %22 = vector.load %arg6[%c0_18, %c0_19] : memref<2x128xf32, #tpu.memory_space<vmem>>, vector<1x128xf32>
    %23 = arith.truncf %20 : vector<8x128xf32> to vector<8x128xbf16>
    %24 = arith.extf %23 : vector<8x128xbf16> to vector<8x128xf32>
    %25 = arith.subf %20, %24 : vector<8x128xf32>
    %26 = arith.truncf %25 : vector<8x128xf32> to vector<8x128xbf16>
    %cst_20 = arith.constant dense<0.000000e+00> : vector<8x128xf32>
    %27 = tpu.matmul %23, %1, %cst_20 {dimension_numbers = #tpu.dot_dimension_numbers<[1], [0], [0], [1], [0, 0, 1, 1], [], []>} : vector<8x128xbf16>, vector<128x128xbf16>, vector<8x128xf32> -> vector<8x128xf32>
    %cst_21 = arith.constant dense<0.000000e+00> : vector<8x128xf32>
    %28 = tpu.matmul %26, %1, %cst_21 {dimension_numbers = #tpu.dot_dimension_numbers<[1], [0], [0], [1], [0, 0, 1, 1], [], []>} : vector<8x128xbf16>, vector<128x128xbf16>, vector<8x128xf32> -> vector<8x128xf32>
    %29 = arith.addf %27, %28 : vector<8x128xf32>
    %30 = arith.subf %20, %29 : vector<8x128xf32>
    %31 = arith.mulf %30, %30 : vector<8x128xf32>
    %32 = arith.truncf %31 : vector<8x128xf32> to vector<8x128xbf16>
    %33 = arith.extf %32 : vector<8x128xbf16> to vector<8x128xf32>
    %34 = arith.subf %31, %33 : vector<8x128xf32>
    %35 = arith.truncf %34 : vector<8x128xf32> to vector<8x128xbf16>
    %cst_22 = arith.constant dense<0.000000e+00> : vector<8x128xf32>
    %36 = tpu.matmul %32, %1, %cst_22 {dimension_numbers = #tpu.dot_dimension_numbers<[1], [0], [0], [1], [0, 0, 1, 1], [], []>} : vector<8x128xbf16>, vector<128x128xbf16>, vector<8x128xf32> -> vector<8x128xf32>
    %cst_23 = arith.constant dense<0.000000e+00> : vector<8x128xf32>
    %37 = tpu.matmul %35, %1, %cst_23 {dimension_numbers = #tpu.dot_dimension_numbers<[1], [0], [0], [1], [0, 0, 1, 1], [], []>} : vector<8x128xbf16>, vector<128x128xbf16>, vector<8x128xf32> -> vector<8x128xf32>
    %38 = arith.addf %36, %37 : vector<8x128xf32>
    %cst_24 = arith.constant 9.99999974E-6 : f32
    %39 = vector.broadcast %cst_24 : f32 to vector<8x128xf32>
    %40 = arith.addf %38, %39 : vector<8x128xf32>
    %41 = math.rsqrt %40 : vector<8x128xf32>
    %42 = arith.mulf %30, %41 : vector<8x128xf32>
    %43 = vector.broadcast %21 : vector<1x128xf32> to vector<8x128xf32>
    %44 = arith.mulf %42, %43 : vector<8x128xf32>
    %45 = vector.broadcast %22 : vector<1x128xf32> to vector<8x128xf32>
    %46 = arith.addf %44, %45 : vector<8x128xf32>
    %47 = arith.truncf %46 : vector<8x128xf32> to vector<8x128xbf16>
    %48 = arith.extf %47 : vector<8x128xbf16> to vector<8x128xf32>
    %49 = arith.subf %46, %48 : vector<8x128xf32>
    %50 = arith.truncf %49 : vector<8x128xf32> to vector<8x128xbf16>
    %c1 = arith.constant 1 : index
    %c0_25 = arith.constant 0 : index
    %c0_26 = arith.constant 0 : index
    %51 = vector.load %arg2[%c1, %c0_25, %c0_26] : memref<2x128x128xbf16, #tpu.memory_space<vmem>>, vector<1x128x128xbf16>
    %52 = vector.shape_cast %51 : vector<1x128x128xbf16> to vector<128x128xbf16>
    %cst_27 = arith.constant dense<0.000000e+00> : vector<8x128xf32>
    %53 = tpu.matmul %47, %52, %cst_27 {dimension_numbers = #tpu.dot_dimension_numbers<[1], [0], [0], [1], [0, 0, 1, 1], [], []>} : vector<8x128xbf16>, vector<128x128xbf16>, vector<8x128xf32> -> vector<8x128xf32>
    %c1_28 = arith.constant 1 : index
    %c0_29 = arith.constant 0 : index
    %c0_30 = arith.constant 0 : index
    %54 = vector.load %arg3[%c1_28, %c0_29, %c0_30] : memref<2x128x128xbf16, #tpu.memory_space<vmem>>, vector<1x128x128xbf16>
    %55 = vector.shape_cast %54 : vector<1x128x128xbf16> to vector<128x128xbf16>
    %cst_31 = arith.constant dense<0.000000e+00> : vector<8x128xf32>
    %56 = tpu.matmul %47, %55, %cst_31 {dimension_numbers = #tpu.dot_dimension_numbers<[1], [0], [0], [1], [0, 0, 1, 1], [], []>} : vector<8x128xbf16>, vector<128x128xbf16>, vector<8x128xf32> -> vector<8x128xf32>
    %57 = arith.addf %53, %56 : vector<8x128xf32>
    %c1_32 = arith.constant 1 : index
    %c0_33 = arith.constant 0 : index
    %c0_34 = arith.constant 0 : index
    %58 = vector.load %arg2[%c1_32, %c0_33, %c0_34] : memref<2x128x128xbf16, #tpu.memory_space<vmem>>, vector<1x128x128xbf16>
    %59 = vector.shape_cast %58 : vector<1x128x128xbf16> to vector<128x128xbf16>
    %cst_35 = arith.constant dense<0.000000e+00> : vector<8x128xf32>
    %60 = tpu.matmul %50, %59, %cst_35 {dimension_numbers = #tpu.dot_dimension_numbers<[1], [0], [0], [1], [0, 0, 1, 1], [], []>} : vector<8x128xbf16>, vector<128x128xbf16>, vector<8x128xf32> -> vector<8x128xf32>
    %61 = arith.addf %57, %60 : vector<8x128xf32>
    %c1_36 = arith.constant 1 : index
    %c0_37 = arith.constant 0 : index
    %62 = vector.load %arg4[%c1_36, %c0_37] : memref<2x128xf32, #tpu.memory_space<vmem>>, vector<1x128xf32>
    %63 = vector.broadcast %62 : vector<1x128xf32> to vector<8x128xf32>
    %64 = arith.addf %61, %63 : vector<8x128xf32>
    %65 = math.tanh %64 : vector<8x128xf32>
    %c1_38 = arith.constant 1 : index
    %c0_39 = arith.constant 0 : index
    %66 = vector.load %arg5[%c1_38, %c0_39] : memref<2x128xf32, #tpu.memory_space<vmem>>, vector<1x128xf32>
    %c1_40 = arith.constant 1 : index
    %c0_41 = arith.constant 0 : index
    %67 = vector.load %arg6[%c1_40, %c0_41] : memref<2x128xf32, #tpu.memory_space<vmem>>, vector<1x128xf32>
    %68 = arith.truncf %65 : vector<8x128xf32> to vector<8x128xbf16>
    %69 = arith.extf %68 : vector<8x128xbf16> to vector<8x128xf32>
    %70 = arith.subf %65, %69 : vector<8x128xf32>
    %71 = arith.truncf %70 : vector<8x128xf32> to vector<8x128xbf16>
    %cst_42 = arith.constant dense<0.000000e+00> : vector<8x128xf32>
    %72 = tpu.matmul %68, %1, %cst_42 {dimension_numbers = #tpu.dot_dimension_numbers<[1], [0], [0], [1], [0, 0, 1, 1], [], []>} : vector<8x128xbf16>, vector<128x128xbf16>, vector<8x128xf32> -> vector<8x128xf32>
    %cst_43 = arith.constant dense<0.000000e+00> : vector<8x128xf32>
    %73 = tpu.matmul %71, %1, %cst_43 {dimension_numbers = #tpu.dot_dimension_numbers<[1], [0], [0], [1], [0, 0, 1, 1], [], []>} : vector<8x128xbf16>, vector<128x128xbf16>, vector<8x128xf32> -> vector<8x128xf32>
    %74 = arith.addf %72, %73 : vector<8x128xf32>
    %75 = arith.subf %65, %74 : vector<8x128xf32>
    %76 = arith.mulf %75, %75 : vector<8x128xf32>
    %77 = arith.truncf %76 : vector<8x128xf32> to vector<8x128xbf16>
    %78 = arith.extf %77 : vector<8x128xbf16> to vector<8x128xf32>
    %79 = arith.subf %76, %78 : vector<8x128xf32>
    %80 = arith.truncf %79 : vector<8x128xf32> to vector<8x128xbf16>
    %cst_44 = arith.constant dense<0.000000e+00> : vector<8x128xf32>
    %81 = tpu.matmul %77, %1, %cst_44 {dimension_numbers = #tpu.dot_dimension_numbers<[1], [0], [0], [1], [0, 0, 1, 1], [], []>} : vector<8x128xbf16>, vector<128x128xbf16>, vector<8x128xf32> -> vector<8x128xf32>
    %cst_45 = arith.constant dense<0.000000e+00> : vector<8x128xf32>
    %82 = tpu.matmul %80, %1, %cst_45 {dimension_numbers = #tpu.dot_dimension_numbers<[1], [0], [0], [1], [0, 0, 1, 1], [], []>} : vector<8x128xbf16>, vector<128x128xbf16>, vector<8x128xf32> -> vector<8x128xf32>
    %83 = arith.addf %81, %82 : vector<8x128xf32>
    %cst_46 = arith.constant 9.99999974E-6 : f32
    %84 = vector.broadcast %cst_46 : f32 to vector<8x128xf32>
    %85 = arith.addf %83, %84 : vector<8x128xf32>
    %86 = math.rsqrt %85 : vector<8x128xf32>
    %87 = arith.mulf %75, %86 : vector<8x128xf32>
    %88 = vector.broadcast %66 : vector<1x128xf32> to vector<8x128xf32>
    %89 = arith.mulf %87, %88 : vector<8x128xf32>
    %90 = vector.broadcast %67 : vector<1x128xf32> to vector<8x128xf32>
    %91 = arith.addf %89, %90 : vector<8x128xf32>
    %92 = arith.addf %0, %91 : vector<8x128xf32>
    %93 = math.tanh %92 : vector<8x128xf32>
    %c0_47 = arith.constant 0 : index
    %c0_48 = arith.constant 0 : index
    %94 = vector.load %arg7[%c0_47, %c0_48] : memref<1x128xf32, #tpu.memory_space<vmem>>, vector<1x128xf32>
    %c0_49 = arith.constant 0 : index
    %c0_50 = arith.constant 0 : index
    %95 = vector.load %arg8[%c0_49, %c0_50] : memref<1x128xf32, #tpu.memory_space<vmem>>, vector<1x128xf32>
    %96 = arith.truncf %93 : vector<8x128xf32> to vector<8x128xbf16>
    %97 = arith.extf %96 : vector<8x128xbf16> to vector<8x128xf32>
    %98 = arith.subf %93, %97 : vector<8x128xf32>
    %99 = arith.truncf %98 : vector<8x128xf32> to vector<8x128xbf16>
    %cst_51 = arith.constant dense<0.000000e+00> : vector<8x128xf32>
    %100 = tpu.matmul %96, %1, %cst_51 {dimension_numbers = #tpu.dot_dimension_numbers<[1], [0], [0], [1], [0, 0, 1, 1], [], []>} : vector<8x128xbf16>, vector<128x128xbf16>, vector<8x128xf32> -> vector<8x128xf32>
    %cst_52 = arith.constant dense<0.000000e+00> : vector<8x128xf32>
    %101 = tpu.matmul %99, %1, %cst_52 {dimension_numbers = #tpu.dot_dimension_numbers<[1], [0], [0], [1], [0, 0, 1, 1], [], []>} : vector<8x128xbf16>, vector<128x128xbf16>, vector<8x128xf32> -> vector<8x128xf32>
    %102 = arith.addf %100, %101 : vector<8x128xf32>
    %103 = arith.subf %93, %102 : vector<8x128xf32>
    %104 = arith.mulf %103, %103 : vector<8x128xf32>
    %105 = arith.truncf %104 : vector<8x128xf32> to vector<8x128xbf16>
    %106 = arith.extf %105 : vector<8x128xbf16> to vector<8x128xf32>
    %107 = arith.subf %104, %106 : vector<8x128xf32>
    %108 = arith.truncf %107 : vector<8x128xf32> to vector<8x128xbf16>
    %cst_53 = arith.constant dense<0.000000e+00> : vector<8x128xf32>
    %109 = tpu.matmul %105, %1, %cst_53 {dimension_numbers = #tpu.dot_dimension_numbers<[1], [0], [0], [1], [0, 0, 1, 1], [], []>} : vector<8x128xbf16>, vector<128x128xbf16>, vector<8x128xf32> -> vector<8x128xf32>
    %cst_54 = arith.constant dense<0.000000e+00> : vector<8x128xf32>
    %110 = tpu.matmul %108, %1, %cst_54 {dimension_numbers = #tpu.dot_dimension_numbers<[1], [0], [0], [1], [0, 0, 1, 1], [], []>} : vector<8x128xbf16>, vector<128x128xbf16>, vector<8x128xf32> -> vector<8x128xf32>
    %111 = arith.addf %109, %110 : vector<8x128xf32>
    %cst_55 = arith.constant 9.99999974E-6 : f32
    %112 = vector.broadcast %cst_55 : f32 to vector<8x128xf32>
    %113 = arith.addf %111, %112 : vector<8x128xf32>
    %114 = math.rsqrt %113 : vector<8x128xf32>
    %115 = arith.mulf %103, %114 : vector<8x128xf32>
    %116 = vector.broadcast %94 : vector<1x128xf32> to vector<8x128xf32>
    %117 = arith.mulf %115, %116 : vector<8x128xf32>
    %118 = vector.broadcast %95 : vector<1x128xf32> to vector<8x128xf32>
    %119 = arith.addf %117, %118 : vector<8x128xf32>
    %c0_56 = arith.constant 0 : index
    %c0_57 = arith.constant 0 : index
    %120 = vector.load %arg10[%c0_56, %c0_57] : memref<8x128xf32, #tpu.memory_space<vmem>>, vector<8x128xf32>
    tpu.vector_store %arg10[%c0_56, %c0_57], %119 {strides = array<i32>} : memref<8x128xf32, #tpu.memory_space<vmem>>, vector<8x128xf32>,
    return
  }
  func.func @transform_0(%arg0: i32) -> (i32, i32) {
    %c0_i32 = arith.constant 0 : i32
    %c0_i32_0 = arith.constant 0 : i32
    return %arg0, %c0_i32 : i32, i32
  }
  func.func @transform_1(%arg0: i32) -> (i32, i32, i32) {
    %c0_i32 = arith.constant 0 : i32
    %c0_i32_0 = arith.constant 0 : i32
    %c0_i32_1 = arith.constant 0 : i32
    %c0_i32_2 = arith.constant 0 : i32
    return %c0_i32, %c0_i32_0, %c0_i32_1 : i32, i32, i32
  }
  func.func @transform_2(%arg0: i32) -> (i32, i32, i32) {
    %c0_i32 = arith.constant 0 : i32
    %c0_i32_0 = arith.constant 0 : i32
    %c0_i32_1 = arith.constant 0 : i32
    %c0_i32_2 = arith.constant 0 : i32
    return %c0_i32, %c0_i32_0, %c0_i32_1 : i32, i32, i32
  }
  func.func @transform_3(%arg0: i32) -> (i32, i32) {
    %c0_i32 = arith.constant 0 : i32
    %c0_i32_0 = arith.constant 0 : i32
    %c0_i32_1 = arith.constant 0 : i32
    return %c0_i32, %c0_i32_0 : i32, i32
  }
  func.func @transform_4(%arg0: i32) -> (i32, i32) {
    %c0_i32 = arith.constant 0 : i32
    %c0_i32_0 = arith.constant 0 : i32
    %c0_i32_1 = arith.constant 0 : i32
    return %c0_i32, %c0_i32_0 : i32, i32
  }
  func.func @transform_5(%arg0: i32) -> (i32, i32) {
    %c0_i32 = arith.constant 0 : i32
    %c0_i32_0 = arith.constant 0 : i32
    %c0_i32_1 = arith.constant 0 : i32
    return %c0_i32, %c0_i32_0 : i32, i32
  }
  func.func @transform_6(%arg0: i32) -> (i32, i32) {
    %c0_i32 = arith.constant 0 : i32
    %c0_i32_0 = arith.constant 0 : i32
    %c0_i32_1 = arith.constant 0 : i32
    return %c0_i32, %c0_i32_0 : i32, i32
  }
  func.func @transform_7(%arg0: i32) -> (i32, i32) {
    %c0_i32 = arith.constant 0 : i32
    %c0_i32_0 = arith.constant 0 : i32
    %c0_i32_1 = arith.constant 0 : i32
    return %c0_i32, %c0_i32_0 : i32, i32
  }
  func.func @transform_8(%arg0: i32) -> (i32, i32) {
    %c0_i32 = arith.constant 0 : i32
    %c0_i32_0 = arith.constant 0 : i32
    %c0_i32_1 = arith.constant 0 : i32
    return %c0_i32, %c0_i32_0 : i32, i32
  }
  func.func @transform_9(%arg0: i32) -> (i32, i32) {
    %c0_i32 = arith.constant 0 : i32
    %c0_i32_0 = arith.constant 0 : i32
    return %arg0, %c0_i32 : i32, i32
  }
}

</mosaic_0001>

<llo_original>
// kernel: tile.29
$region0: #{tile.29}
  %s0 = inlined_call_operand.vmem [shape: f32[2,4,32], index: 0, kind: input, shape index: {}]
  %s1 = inlined_call_operand.vmem [shape: f32[2,128], index: 1, kind: output, shape index: {}]
  $region1: #{tile.29} parent=0
    #allocation0 [shape = 'u8[4096]{0}', space=vmem, size = 0x1000, scoped, tag = 'scoped mem for output reshape']
    #allocation1 [shape = 'u8[8192]{0}', space=vmem, size = 0x2000, scoped, tag = 'scoped mem for input reshape']
    %s3 = ssub.s32 16, 1
    %s4 = scalar_lea.vmem %s0, 4
    %v5 = vld [vmem:[%s4] sm:%s3]
    %s6 = scalar_lea.vmem [#allocation1], 8
    %7 = vst [vmem:[%s6] sm:%s3] %v5
    %v8 = vld [vmem:[%s0] sm:%s3]
    %9 = vst [vmem:[#allocation1] sm:%s3] %v8
    %s10 = smov 3
    %v11 = vld [vmem:[#allocation1] ss:$8 sm:%s10]
    %vm12 = vcmask 261120
    %13 = vst.msk [vmem:[#allocation0] sm:$0x3] %vm12, %v11
    %s14 = scalar_lea.vmem [#allocation1], 3
    %s15 = smov 3
    %v16 = vld [vmem:[%s14] ss:$8 sm:%s15]
    %17 = vrot.lane.b32.xlu0 %v16, 96
    %v18 = vpop.permute.xlu0 %17
    %vm19 = vcmask 1048320
    %20 = vst.msk [vmem:[#allocation0] sm:$0x3] %vm19, %v18
    %s21 = scalar_lea.vmem [#allocation1], 2
    %s22 = smov 3
    %v23 = vld [vmem:[%s21] ss:$8 sm:%s22]
    %24 = vrot.lane.b32.xlu0 %v23, 64
    %v25 = vpop.permute.xlu0 %24
    %vm26 = vcmask 785920
    %27 = vst.msk [vmem:[#allocation0] sm:$0x3] %vm26, %v25
    %s28 = scalar_lea.vmem [#allocation1], 1
    %s29 = smov 3
    %v30 = vld [vmem:[%s28] ss:$8 sm:%s29]
    %31 = vrot.lane.b32.xlu0 %v30, 32
    %v32 = vpop.permute.xlu0 %31
    %vm33 = vcmask 523520
    %34 = vst.msk [vmem:[#allocation0] sm:$0x3] %vm33, %v32
    %s36 = ssub.s32 4, 1
    %v37 = vld [vmem:[#allocation0] sm:%s36]
    %s39 = ssub.s32 4, 1
    %40 = vst [vmem:[%s1] sm:%s39] %v37

// kernel: res_dnn_forward.1
$region0: #{res_dnn_forward.1}
  #allocation0 [shape = 'u32[]', space=smem, size = 0x4, offset = 0x4, fixed_abs, tag = 'smem constant byte address 0x4 - core index']
  #allocation1 [shape = 'u32[72,128]{1,0:T(1,128)}', space=vmem, size = 0x9000, scoped, tag = 'internal scratch']
  %s0 = inlined_call_operand.vmem [shape: f32[4,128], index: 0, kind: input, shape index: {}]
  %s1 = inlined_call_operand.vmem [shape: bf16[2,128,128], index: 1, kind: input, shape index: {}]
  %s2 = inlined_call_operand.vmem [shape: bf16[2,128,128], index: 2, kind: input, shape index: {}]
  %s3 = inlined_call_operand.vmem [shape: f32[2,128], index: 3, kind: input, shape index: {}]
  %s4 = inlined_call_operand.vmem [shape: f32[2,128], index: 4, kind: input, shape index: {}]
  %s5 = inlined_call_operand.vmem [shape: f32[2,128], index: 5, kind: input, shape index: {}]
  %s6 = inlined_call_operand.vmem [shape: f32[1,128], index: 6, kind: input, shape index: {}]
  %s7 = inlined_call_operand.vmem [shape: f32[1,128], index: 7, kind: input, shape index: {}]
  %s8 = inlined_call_operand.vmem [shape: bf16[128,128], index: 8, kind: input, shape index: {}]
  %s9 = inlined_call_operand.vmem [shape: f32[4,128], index: 9, kind: output, shape index: {}]
  %s10 = sld [smem:[#allocation0]]
  $region76: #{res_dnn_forward.1} parent=0
    _
  %s12 = ssub.s32 1, %s10
  %s13 = scalar_select 0, %s12, %s10
  $region1: #{res_dnn_forward.1} parent=0
    #allocation2 [shape = 'u8[4096]{0}', space=vmem, size = 0x1000, scoped, tag = 'output window, operand 0, single buffered']
    // Predicated region
    $region2: #{res_dnn_forward.1} parent=1 // pred_check
      _
    $region3: #{res_dnn_forward.1} parent=1 // pred_check_branch
      %15 = sbr.rel (0) target = $region5
    $region4: #{res_dnn_forward.1} parent=1 // pred_region
      _
    $region5: #{res_dnn_forward.1} parent=1 // pred_fallthru
      _
    // Predicated region
    $region6: #{res_dnn_forward.1} parent=1 // pred_check
      _
    $region7: #{res_dnn_forward.1} parent=1 // pred_check_branch
      %17 = sbr.rel (0) target = $region9
    $region8: #{res_dnn_forward.1} parent=1 // pred_region
      _
    $region9: #{res_dnn_forward.1} parent=1 // pred_fallthru
      _
    // Predicated region
    $region10: #{res_dnn_forward.1} parent=1 // pred_check
      _
    $region11: #{res_dnn_forward.1} parent=1 // pred_check_branch
      %19 = sbr.rel (0) target = $region13
    $region12: #{res_dnn_forward.1} parent=1 // pred_region
      _
    $region13: #{res_dnn_forward.1} parent=1 // pred_fallthru
      _
    // Predicated region
    $region14: #{res_dnn_forward.1} parent=1 // pred_check
      _
    $region15: #{res_dnn_forward.1} parent=1 // pred_check_branch
      %21 = sbr.rel (0) target = $region17
    $region16: #{res_dnn_forward.1} parent=1 // pred_region
      _
    $region17: #{res_dnn_forward.1} parent=1 // pred_fallthru
      _
    // Predicated region
    $region18: #{res_dnn_forward.1} parent=1 // pred_check
      _
    $region19: #{res_dnn_forward.1} parent=1 // pred_check_branch
      %23 = sbr.rel (0) target = $region21
    $region20: #{res_dnn_forward.1} parent=1 // pred_region
      _
    $region21: #{res_dnn_forward.1} parent=1 // pred_fallthru
      _
    // Predicated region
    $region22: #{res_dnn_forward.1} parent=1 // pred_check
      _
    $region23: #{res_dnn_forward.1} parent=1 // pred_check_branch
      %25 = sbr.rel (0) target = $region25
    $region24: #{res_dnn_forward.1} parent=1 // pred_region
      _
    $region25: #{res_dnn_forward.1} parent=1 // pred_fallthru
      _
    // Predicated region
    $region26: #{res_dnn_forward.1} parent=1 // pred_check
      _
    $region27: #{res_dnn_forward.1} parent=1 // pred_check_branch
      %27 = sbr.rel (0) target = $region29
    $region28: #{res_dnn_forward.1} parent=1 // pred_region
      _
    $region29: #{res_dnn_forward.1} parent=1 // pred_fallthru
      _
    // Predicated region
    $region30: #{res_dnn_forward.1} parent=1 // pred_check
      _
    $region31: #{res_dnn_forward.1} parent=1 // pred_check_branch
      %29 = sbr.rel (0) target = $region33
    $region32: #{res_dnn_forward.1} parent=1 // pred_region
      _
    $region33: #{res_dnn_forward.1} parent=1 // pred_fallthru
      _
    // Predicated region
    $region34: #{res_dnn_forward.1} parent=1 // pred_check
      _
    $region35: #{res_dnn_forward.1} parent=1 // pred_check_branch
      %31 = sbr.rel (0) target = $region37
    $region36: #{res_dnn_forward.1} parent=1 // pred_region
      _
    $region37: #{res_dnn_forward.1} parent=1 // pred_fallthru
      _
    %v32 = vld [vmem:[%s0] sm:$0xff]
    %v33 = vld [vmem:[%s8] sm:$0xf]
    %v34 = vld [vmem:[%s8 + $0x4] sm:$0xf]
    %v35 = vld [vmem:[%s8 + $0x8] sm:$0xf]
    %v36 = vld [vmem:[%s8 + $0xc] sm:$0xf]
    %v37 = vld [vmem:[%s8 + $0x10] sm:$0xf]
    %v38 = vld [vmem:[%s8 + $0x14] sm:$0xf]
    %v39 = vld [vmem:[%s8 + $0x18] sm:$0xf]
    %v40 = vld [vmem:[%s8 + $0x1c] sm:$0xf]
    %v41 = vld [vmem:[%s8 + $0x20] sm:$0xf]
    %v42 = vld [vmem:[%s8 + $0x24] sm:$0xf]
    %v43 = vld [vmem:[%s8 + $0x28] sm:$0xf]
    %v44 = vld [vmem:[%s8 + $0x2c] sm:$0xf]
    %v45 = vld [vmem:[%s8 + $0x30] sm:$0xf]
    %v46 = vld [vmem:[%s8 + $0x34] sm:$0xf]
    %v47 = vld [vmem:[%s8 + $0x38] sm:$0xf]
    %v48 = vld [vmem:[%s8 + $0x3c] sm:$0xf]
    %v49 = vpack.c.bf16 %v32, %v32
    %v50 = vunpack.c.l.bf16 %v49
    %v51 = vsub.f32 %v32, %v50
    %v52 = vpack.c.bf16 %v51, %v51
    %v53 = vld [vmem:[%s1] sm:$0xf]
    %v54 = vld [vmem:[%s1 + $0x4] sm:$0xf]
    %v55 = vld [vmem:[%s1 + $0x8] sm:$0xf]
    %v56 = vld [vmem:[%s1 + $0xc] sm:$0xf]
    %v57 = vld [vmem:[%s1 + $0x10] sm:$0xf]
    %v58 = vld [vmem:[%s1 + $0x14] sm:$0xf]
    %v59 = vld [vmem:[%s1 + $0x18] sm:$0xf]
    %v60 = vld [vmem:[%s1 + $0x1c] sm:$0xf]
    %v61 = vld [vmem:[%s1 + $0x20] sm:$0xf]
    %v62 = vld [vmem:[%s1 + $0x24] sm:$0xf]
    %v63 = vld [vmem:[%s1 + $0x28] sm:$0xf]
    %v64 = vld [vmem:[%s1 + $0x2c] sm:$0xf]
    %v65 = vld [vmem:[%s1 + $0x30] sm:$0xf]
    %v66 = vld [vmem:[%s1 + $0x34] sm:$0xf]
    %v67 = vld [vmem:[%s1 + $0x38] sm:$0xf]
    %v68 = vld [vmem:[%s1 + $0x3c] sm:$0xf]
    %v69 = vld [vmem:[%s2] sm:$0xf]
    %v70 = vld [vmem:[%s2 + $0x4] sm:$0xf]
    %v71 = vld [vmem:[%s2 + $0x8] sm:$0xf]
    %v72 = vld [vmem:[%s2 + $0xc] sm:$0xf]
    %v73 = vld [vmem:[%s2 + $0x10] sm:$0xf]
    %v74 = vld [vmem:[%s2 + $0x14] sm:$0xf]
    %v75 = vld [vmem:[%s2 + $0x18] sm:$0xf]
    %v76 = vld [vmem:[%s2 + $0x1c] sm:$0xf]
    %v77 = vld [vmem:[%s2 + $0x20] sm:$0xf]
    %v78 = vld [vmem:[%s2 + $0x24] sm:$0xf]
    %v79 = vld [vmem:[%s2 + $0x28] sm:$0xf]
    %v80 = vld [vmem:[%s2 + $0x2c] sm:$0xf]
    %v81 = vld [vmem:[%s2 + $0x30] sm:$0xf]
    %v82 = vld [vmem:[%s2 + $0x34] sm:$0xf]
    %v83 = vld [vmem:[%s2 + $0x38] sm:$0xf]
    %v84 = vld [vmem:[%s2 + $0x3c] sm:$0xf]
    %v101 = vunpack.c.l.b16 %v69
    %v102 = vunpack.c.l.b16 %v70
    %v103 = vunpack.c.l.b16 %v71
    %v104 = vunpack.c.l.b16 %v72
    %v105 = vunpack.c.l.b16 %v73
    %v106 = vunpack.c.l.b16 %v74
    %v107 = vunpack.c.l.b16 %v75
    %v108 = vunpack.c.l.b16 %v76
    %v109 = vunpack.c.l.b16 %v77
    %v110 = vunpack.c.l.b16 %v78
    %v111 = vunpack.c.l.b16 %v79
    %v112 = vunpack.c.l.b16 %v80
    %v113 = vunpack.c.l.b16 %v81
    %v114 = vunpack.c.l.b16 %v82
    %v115 = vunpack.c.l.b16 %v83
    %v116 = vunpack.c.l.b16 %v84
    %v117 = vpack.c.b16 %v102, %v101
    %v118 = vpack.c.b16 %v104, %v103
    %v119 = vpack.c.b16 %v106, %v105
    %v120 = vpack.c.b16 %v108, %v107
    %v121 = vpack.c.b16 %v110, %v109
    %v122 = vpack.c.b16 %v112, %v111
    %v123 = vpack.c.b16 %v114, %v113
    %v124 = vpack.c.b16 %v116, %v115
    %133 = vmatpush.bf16.msra.mxu0 %v124
    %134 = vmatpush.bf16.msra.mxu0 %v123
    %135 = vmatpush.bf16.msra.mxu0 %v122
    %136 = vmatpush.bf16.msra.mxu0 %v121
    %137 = vmatpush.bf16.msra.mxu0 %v120
    %138 = vmatpush.bf16.msra.mxu0 %v119
    %139 = vmatpush.bf16.msra.mxu0 %v118
    %140 = vmatpush.bf16.msra.mxu0 %v117
    %141 = vmatmul.bf16.gmra.mxu0 %v49
    %v142 = vpop.f32.mrf.mxu0
    %v143 = vadd.f32 0.0, %v142
    %v144 = vpop.f32.mrf.mxu0
    %145 = vdwg.mxu0
    %v162 = vunpack.c.l.b16 %v53
    %v163 = vunpack.c.l.b16 %v54
    %v164 = vunpack.c.l.b16 %v55
    %v165 = vunpack.c.l.b16 %v56
    %v166 = vunpack.c.l.b16 %v57
    %v167 = vunpack.c.l.b16 %v58
    %v168 = vunpack.c.l.b16 %v59
    %v169 = vunpack.c.l.b16 %v60
    %v170 = vunpack.c.l.b16 %v61
    %v171 = vunpack.c.l.b16 %v62
    %v172 = vunpack.c.l.b16 %v63
    %v173 = vunpack.c.l.b16 %v64
    %v174 = vunpack.c.l.b16 %v65
    %v175 = vunpack.c.l.b16 %v66
    %v176 = vunpack.c.l.b16 %v67
    %v177 = vunpack.c.l.b16 %v68
    %v178 = vpack.c.b16 %v163, %v162
    %v179 = vpack.c.b16 %v165, %v164
    %v180 = vpack.c.b16 %v167, %v166
    %v181 = vpack.c.b16 %v169, %v168
    %v182 = vpack.c.b16 %v171, %v170
    %v183 = vpack.c.b16 %v173, %v172
    %v184 = vpack.c.b16 %v175, %v174
    %v185 = vpack.c.b16 %v177, %v176
    %194 = vmatpush.bf16.msra.mxu0 %v185
    %195 = vmatpush.bf16.msra.mxu0 %v184
    %196 = vmatpush.bf16.msra.mxu0 %v183
    %197 = vmatpush.bf16.msra.mxu0 %v182
    %198 = vmatpush.bf16.msra.mxu0 %v181
    %199 = vmatpush.bf16.msra.mxu0 %v180
    %200 = vmatpush.bf16.msra.mxu0 %v179
    %201 = vmatpush.bf16.msra.mxu0 %v178
    %202 = vmatmul.bf16.gmra.mxu0 %v49
    %v203 = vpop.f32.mrf.mxu0
    %v204 = vadd.f32 %v143, %v203
    %v205 = vpop.f32.mrf.mxu0
    %206 = vdwg.mxu0
    %207 = vmatpush.bf16.msra.mxu0 %v185
    %208 = vmatpush.bf16.msra.mxu0 %v184
    %209 = vmatpush.bf16.msra.mxu0 %v183
    %210 = vmatpush.bf16.msra.mxu0 %v182
    %211 = vmatpush.bf16.msra.mxu0 %v181
    %212 = vmatpush.bf16.msra.mxu0 %v180
    %213 = vmatpush.bf16.msra.mxu0 %v179
    %214 = vmatpush.bf16.msra.mxu0 %v178
    %215 = vmatmul.bf16.gmra.mxu0 %v52
    %v216 = vpop.f32.mrf.mxu0
    %v217 = vadd.f32 0.0, %v216
    %v218 = vpop.f32.mrf.mxu0
    %219 = vdwg.mxu0
    %v220 = vadd.f32 %v204, %v217
    %v221 = vld [vmem:[%s3] sm:$0x1]
    %v222 = vperm.slane %v221, 0
    %v223 = vadd.f32 %v220, %v222
    %v224 = vtanh.pop %v223
    %v225 = vld [vmem:[%s4] sm:$0x1]
    %v226 = vld [vmem:[%s5] sm:$0x1]
    %v227 = vpack.c.bf16 %v224, %v224
    %v228 = vunpack.c.l.bf16 %v227
    %v229 = vsub.f32 %v224, %v228
    %v230 = vpack.c.bf16 %v229, %v229
    %v247 = vunpack.c.l.b16 %v33
    %v248 = vunpack.c.l.b16 %v34
    %v249 = vunpack.c.l.b16 %v35
    %v250 = vunpack.c.l.b16 %v36
    %v251 = vunpack.c.l.b16 %v37
    %v252 = vunpack.c.l.b16 %v38
    %v253 = vunpack.c.l.b16 %v39
    %v254 = vunpack.c.l.b16 %v40
    %v255 = vunpack.c.l.b16 %v41
    %v256 = vunpack.c.l.b16 %v42
    %v257 = vunpack.c.l.b16 %v43
    %v258 = vunpack.c.l.b16 %v44
    %v259 = vunpack.c.l.b16 %v45
    %v260 = vunpack.c.l.b16 %v46
    %v261 = vunpack.c.l.b16 %v47
    %v262 = vunpack.c.l.b16 %v48
    %v263 = vpack.c.b16 %v248, %v247
    %v264 = vpack.c.b16 %v250, %v249
    %v265 = vpack.c.b16 %v252, %v251
    %v266 = vpack.c.b16 %v254, %v253
    %v267 = vpack.c.b16 %v256, %v255
    %v268 = vpack.c.b16 %v258, %v257
    %v269 = vpack.c.b16 %v260, %v259
    %v270 = vpack.c.b16 %v262, %v261
    %279 = vmatpush.bf16.msra.mxu0 %v270
    %280 = vmatpush.bf16.msra.mxu0 %v269
    %281 = vmatpush.bf16.msra.mxu0 %v268
    %282 = vmatpush.bf16.msra.mxu0 %v267
    %283 = vmatpush.bf16.msra.mxu0 %v266
    %284 = vmatpush.bf16.msra.mxu0 %v265
    %285 = vmatpush.bf16.msra.mxu0 %v264
    %286 = vmatpush.bf16.msra.mxu0 %v263
    %287 = vmatmul.bf16.gmra.mxu0 %v230
    %v288 = vpop.f32.mrf.mxu0
    %v289 = vadd.f32 0.0, %v288
    %v290 = vpop.f32.mrf.mxu0
    %291 = vdwg.mxu0
    %292 = vmatpush.bf16.msra.mxu0 %v270
    %293 = vmatpush.bf16.msra.mxu0 %v269
    %294 = vmatpush.bf16.msra.mxu0 %v268
    %295 = vmatpush.bf16.msra.mxu0 %v267
    %296 = vmatpush.bf16.msra.mxu0 %v266
    %297 = vmatpush.bf16.msra.mxu0 %v265
    %298 = vmatpush.bf16.msra.mxu0 %v264
    %299 = vmatpush.bf16.msra.mxu0 %v263
    %300 = vmatmul.bf16.gmra.mxu0 %v227
    %v301 = vpop.f32.mrf.mxu0
    %v302 = vadd.f32 %v289, %v301
    %v303 = vpop.f32.mrf.mxu0
    %304 = vdwg.mxu0
    %v305 = vsub.f32 %v224, %v302
    %v306 = vmul.f32 %v305, %v305
    %v307 = vpack.c.bf16 %v306, %v306
    %v308 = vunpack.c.l.bf16 %v307
    %v309 = vsub.f32 %v306, %v308
    %v310 = vpack.c.bf16 %v309, %v309
    %311 = vmatpush.bf16.msra.mxu0 %v270
    %312 = vmatpush.bf16.msra.mxu0 %v269
    %313 = vmatpush.bf16.msra.mxu0 %v268
    %314 = vmatpush.bf16.msra.mxu0 %v267
    %315 = vmatpush.bf16.msra.mxu0 %v266
    %316 = vmatpush.bf16.msra.mxu0 %v265
    %317 = vmatpush.bf16.msra.mxu0 %v264
    %318 = vmatpush.bf16.msra.mxu0 %v263
    %319 = vmatmul.bf16.gmra.mxu0 %v310
    %v320 = vpop.f32.mrf.mxu0
    %v321 = vadd.f32 0.0, %v320
    %v322 = vpop.f32.mrf.mxu0
    %323 = vdwg.mxu0
    %324 = vmatpush.bf16.msra.mxu0 %v270
    %325 = vmatpush.bf16.msra.mxu0 %v269
    %326 = vmatpush.bf16.msra.mxu0 %v268
    %327 = vmatpush.bf16.msra.mxu0 %v267
    %328 = vmatpush.bf16.msra.mxu0 %v266
    %329 = vmatpush.bf16.msra.mxu0 %v265
    %330 = vmatpush.bf16.msra.mxu0 %v264
    %331 = vmatpush.bf16.msra.mxu0 %v263
    %332 = vmatmul.bf16.gmra.mxu0 %v307
    %v333 = vpop.f32.mrf.mxu0
    %v334 = vadd.f32 %v321, %v333
    %v335 = vpop.f32.mrf.mxu0
    %336 = vdwg.mxu0
    %v337 = vadd.f32 %v334, 1e-05
    %v338 = vrsqrt.pop %v337
    %v339 = vmul.f32 %v338, %v337
    %v340 = vmul.f32 %v339, %v338
    %v341 = vmul.f32 0.5, %v340
    %v342 = vsub.f32 1.5, %v341
    %v343 = vmul.f32 %v338, %v342
    %vm344 = vweird.f32 %v337
    %vm345 = vweird.f32 %v338
    %vm346 = vmor %vm344, %vm345
    %v347 = vsel %vm346, %v338, %v343
    %v348 = vmul.f32 %v305, %v347
    %v349 = vperm.slane %v225, 0
    %v350 = vmul.f32 %v348, %v349
    %v351 = vperm.slane %v226, 0
    %v352 = vadd.f32 %v350, %v351
    %v353 = vpack.c.bf16 %v352, %v352
    %v354 = vunpack.c.l.bf16 %v353
    %v355 = vsub.f32 %v352, %v354
    %v356 = vpack.c.bf16 %v355, %v355
    %s357 = scalar_lea.vmem %s1, 64
    %v358 = vld [vmem:[%s357] sm:$0xf]
    %v359 = vld [vmem:[%s357 + $0x4] sm:$0xf]
    %v360 = vld [vmem:[%s357 + $0x8] sm:$0xf]
    %v361 = vld [vmem:[%s357 + $0xc] sm:$0xf]
    %v362 = vld [vmem:[%s357 + $0x10] sm:$0xf]
    %v363 = vld [vmem:[%s357 + $0x14] sm:$0xf]
    %v364 = vld [vmem:[%s357 + $0x18] sm:$0xf]
    %v365 = vld [vmem:[%s357 + $0x1c] sm:$0xf]
    %v366 = vld [vmem:[%s357 + $0x20] sm:$0xf]
    %v367 = vld [vmem:[%s357 + $0x24] sm:$0xf]
    %v368 = vld [vmem:[%s357 + $0x28] sm:$0xf]
    %v369 = vld [vmem:[%s357 + $0x2c] sm:$0xf]
    %v370 = vld [vmem:[%s357 + $0x30] sm:$0xf]
    %v371 = vld [vmem:[%s357 + $0x34] sm:$0xf]
    %v372 = vld [vmem:[%s357 + $0x38] sm:$0xf]
    %v373 = vld [vmem:[%s357 + $0x3c] sm:$0xf]
    %s374 = scalar_lea.vmem %s2, 64
    %v375 = vld [vmem:[%s374] sm:$0xf]
    %v376 = vld [vmem:[%s374 + $0x4] sm:$0xf]
    %v377 = vld [vmem:[%s374 + $0x8] sm:$0xf]
    %v378 = vld [vmem:[%s374 + $0xc] sm:$0xf]
    %v379 = vld [vmem:[%s374 + $0x10] sm:$0xf]
    %v380 = vld [vmem:[%s374 + $0x14] sm:$0xf]
    %v381 = vld [vmem:[%s374 + $0x18] sm:$0xf]
    %v382 = vld [vmem:[%s374 + $0x1c] sm:$0xf]
    %v383 = vld [vmem:[%s374 + $0x20] sm:$0xf]
    %v384 = vld [vmem:[%s374 + $0x24] sm:$0xf]
    %v385 = vld [vmem:[%s374 + $0x28] sm:$0xf]
    %v386 = vld [vmem:[%s374 + $0x2c] sm:$0xf]
    %v387 = vld [vmem:[%s374 + $0x30] sm:$0xf]
    %v388 = vld [vmem:[%s374 + $0x34] sm:$0xf]
    %v389 = vld [vmem:[%s374 + $0x38] sm:$0xf]
    %v390 = vld [vmem:[%s374 + $0x3c] sm:$0xf]
    %v407 = vunpack.c.l.b16 %v375
    %v408 = vunpack.c.l.b16 %v376
    %v409 = vunpack.c.l.b16 %v377
    %v410 = vunpack.c.l.b16 %v378
    %v411 = vunpack.c.l.b16 %v379
    %v412 = vunpack.c.l.b16 %v380
    %v413 = vunpack.c.l.b16 %v381
    %v414 = vunpack.c.l.b16 %v382
    %v415 = vunpack.c.l.b16 %v383
    %v416 = vunpack.c.l.b16 %v384
    %v417 = vunpack.c.l.b16 %v385
    %v418 = vunpack.c.l.b16 %v386
    %v419 = vunpack.c.l.b16 %v387
    %v420 = vunpack.c.l.b16 %v388
    %v421 = vunpack.c.l.b16 %v389
    %v422 = vunpack.c.l.b16 %v390
    %v423 = vpack.c.b16 %v408, %v407
    %v424 = vpack.c.b16 %v410, %v409
    %v425 = vpack.c.b16 %v412, %v411
    %v426 = vpack.c.b16 %v414, %v413
    %v427 = vpack.c.b16 %v416, %v415
    %v428 = vpack.c.b16 %v418, %v417
    %v429 = vpack.c.b16 %v420, %v419
    %v430 = vpack.c.b16 %v422, %v421
    %439 = vmatpush.bf16.msra.mxu0 %v430
    %440 = vmatpush.bf16.msra.mxu0 %v429
    %441 = vmatpush.bf16.msra.mxu0 %v428
    %442 = vmatpush.bf16.msra.mxu0 %v427
    %443 = vmatpush.bf16.msra.mxu0 %v426
    %444 = vmatpush.bf16.msra.mxu0 %v425
    %445 = vmatpush.bf16.msra.mxu0 %v424
    %446 = vmatpush.bf16.msra.mxu0 %v423
    %447 = vmatmul.bf16.gmra.mxu0 %v353
    %v448 = vpop.f32.mrf.mxu0
    %v449 = vadd.f32 0.0, %v448
    %v450 = vpop.f32.mrf.mxu0
    %451 = vdwg.mxu0
    %v468 = vunpack.c.l.b16 %v358
    %v469 = vunpack.c.l.b16 %v359
    %v470 = vunpack.c.l.b16 %v360
    %v471 = vunpack.c.l.b16 %v361
    %v472 = vunpack.c.l.b16 %v362
    %v473 = vunpack.c.l.b16 %v363
    %v474 = vunpack.c.l.b16 %v364
    %v475 = vunpack.c.l.b16 %v365
    %v476 = vunpack.c.l.b16 %v366
    %v477 = vunpack.c.l.b16 %v367
    %v478 = vunpack.c.l.b16 %v368
    %v479 = vunpack.c.l.b16 %v369
    %v480 = vunpack.c.l.b16 %v370
    %v481 = vunpack.c.l.b16 %v371
    %v482 = vunpack.c.l.b16 %v372
    %v483 = vunpack.c.l.b16 %v373
    %v484 = vpack.c.b16 %v469, %v468
    %v485 = vpack.c.b16 %v471, %v470
    %v486 = vpack.c.b16 %v473, %v472
    %v487 = vpack.c.b16 %v475, %v474
    %v488 = vpack.c.b16 %v477, %v476
    %v489 = vpack.c.b16 %v479, %v478
    %v490 = vpack.c.b16 %v481, %v480
    %v491 = vpack.c.b16 %v483, %v482
    %500 = vmatpush.bf16.msra.mxu0 %v491
    %501 = vmatpush.bf16.msra.mxu0 %v490
    %502 = vmatpush.bf16.msra.mxu0 %v489
    %503 = vmatpush.bf16.msra.mxu0 %v488
    %504 = vmatpush.bf16.msra.mxu0 %v487
    %505 = vmatpush.bf16.msra.mxu0 %v486
    %506 = vmatpush.bf16.msra.mxu0 %v485
    %507 = vmatpush.bf16.msra.mxu0 %v484
    %508 = vmatmul.bf16.gmra.mxu0 %v353
    %v509 = vpop.f32.mrf.mxu0
    %v510 = vadd.f32 %v449, %v509
    %v511 = vpop.f32.mrf.mxu0
    %512 = vdwg.mxu0
    %513 = vmatpush.bf16.msra.mxu0 %v491
    %514 = vmatpush.bf16.msra.mxu0 %v490
    %515 = vmatpush.bf16.msra.mxu0 %v489
    %516 = vmatpush.bf16.msra.mxu0 %v488
    %517 = vmatpush.bf16.msra.mxu0 %v487
    %518 = vmatpush.bf16.msra.mxu0 %v486
    %519 = vmatpush.bf16.msra.mxu0 %v485
    %520 = vmatpush.bf16.msra.mxu0 %v484
    %521 = vmatmul.bf16.gmra.mxu0 %v356
    %v522 = vpop.f32.mrf.mxu0
    %v523 = vadd.f32 0.0, %v522
    %v524 = vpop.f32.mrf.mxu0
    %525 = vdwg.mxu0
    %v526 = vadd.f32 %v510, %v523
    %v527 = vld [vmem:[%s3 + $0x1] sm:$0x1]
    %v528 = vperm.slane %v527, 0
    %v529 = vadd.f32 %v526, %v528
    %v530 = vtanh.pop %v529
    %v531 = vld [vmem:[%s4 + $0x1] sm:$0x1]
    %v532 = vld [vmem:[%s5 + $0x1] sm:$0x1]
    %v533 = vpack.c.bf16 %v530, %v530
    %v534 = vunpack.c.l.bf16 %v533
    %v535 = vsub.f32 %v530, %v534
    %v536 = vpack.c.bf16 %v535, %v535
    %537 = vmatpush.bf16.msra.mxu0 %v270
    %538 = vmatpush.bf16.msra.mxu0 %v269
    %539 = vmatpush.bf16.msra.mxu0 %v268
    %540 = vmatpush.bf16.msra.mxu0 %v267
    %541 = vmatpush.bf16.msra.mxu0 %v266
    %542 = vmatpush.bf16.msra.mxu0 %v265
    %543 = vmatpush.bf16.msra.mxu0 %v264
    %544 = vmatpush.bf16.msra.mxu0 %v263
    %545 = vmatmul.bf16.gmra.mxu0 %v536
    %v546 = vpop.f32.mrf.mxu0
    %v547 = vadd.f32 0.0, %v546
    %v548 = vpop.f32.mrf.mxu0
    %549 = vdwg.mxu0
    %550 = vmatpush.bf16.msra.mxu0 %v270
    %551 = vmatpush.bf16.msra.mxu0 %v269
    %552 = vmatpush.bf16.msra.mxu0 %v268
    %553 = vmatpush.bf16.msra.mxu0 %v267
    %554 = vmatpush.bf16.msra.mxu0 %v266
    %555 = vmatpush.bf16.msra.mxu0 %v265
    %556 = vmatpush.bf16.msra.mxu0 %v264
    %557 = vmatpush.bf16.msra.mxu0 %v263
    %558 = vmatmul.bf16.gmra.mxu0 %v533
    %v559 = vpop.f32.mrf.mxu0
    %v560 = vadd.f32 %v547, %v559
    %v561 = vpop.f32.mrf.mxu0
    %562 = vdwg.mxu0
    %v563 = vsub.f32 %v530, %v560
    %v564 = vmul.f32 %v563, %v563
    %v565 = vpack.c.bf16 %v564, %v564
    %v566 = vunpack.c.l.bf16 %v565
    %v567 = vsub.f32 %v564, %v566
    %v568 = vpack.c.bf16 %v567, %v567
    %569 = vmatpush.bf16.msra.mxu0 %v270
    %570 = vmatpush.bf16.msra.mxu0 %v269
    %571 = vmatpush.bf16.msra.mxu0 %v268
    %572 = vmatpush.bf16.msra.mxu0 %v267
    %573 = vmatpush.bf16.msra.mxu0 %v266
    %574 = vmatpush.bf16.msra.mxu0 %v265
    %575 = vmatpush.bf16.msra.mxu0 %v264
    %576 = vmatpush.bf16.msra.mxu0 %v263
    %577 = vmatmul.bf16.gmra.mxu0 %v568
    %v578 = vpop.f32.mrf.mxu0
    %v579 = vadd.f32 0.0, %v578
    %v580 = vpop.f32.mrf.mxu0
    %581 = vdwg.mxu0
    %582 = vmatpush.bf16.msra.mxu0 %v270
    %583 = vmatpush.bf16.msra.mxu0 %v269
    %584 = vmatpush.bf16.msra.mxu0 %v268
    %585 = vmatpush.bf16.msra.mxu0 %v267
    %586 = vmatpush.bf16.msra.mxu0 %v266
    %587 = vmatpush.bf16.msra.mxu0 %v265
    %588 = vmatpush.bf16.msra.mxu0 %v264
    %589 = vmatpush.bf16.msra.mxu0 %v263
    %590 = vmatmul.bf16.gmra.mxu0 %v565
    %v591 = vpop.f32.mrf.mxu0
    %v592 = vadd.f32 %v579, %v591
    %v593 = vpop.f32.mrf.mxu0
    %594 = vdwg.mxu0
    %v595 = vadd.f32 %v592, 1e-05
    %v596 = vrsqrt.pop %v595
    %v597 = vmul.f32 %v596, %v595
    %v598 = vmul.f32 %v597, %v596
    %v599 = vmul.f32 0.5, %v598
    %v600 = vsub.f32 1.5, %v599
    %v601 = vmul.f32 %v596, %v600
    %vm602 = vweird.f32 %v595
    %vm603 = vweird.f32 %v596
    %vm604 = vmor %vm602, %vm603
    %v605 = vsel %vm604, %v596, %v601
    %v606 = vmul.f32 %v563, %v605
    %v607 = vperm.slane %v531, 0
    %v608 = vmul.f32 %v606, %v607
    %v609 = vperm.slane %v532, 0
    %v610 = vadd.f32 %v608, %v609
    %v611 = vadd.f32 %v32, %v610
    %v612 = vtanh.pop %v611
    %v613 = vld [vmem:[%s6] sm:$0x1]
    %v614 = vld [vmem:[%s7] sm:$0x1]
    %v615 = vpack.c.bf16 %v612, %v612
    %v616 = vunpack.c.l.bf16 %v615
    %v617 = vsub.f32 %v612, %v616
    %v618 = vpack.c.bf16 %v617, %v617
    %619 = vmatpush.bf16.msra.mxu0 %v270
    %620 = vmatpush.bf16.msra.mxu0 %v269
    %621 = vmatpush.bf16.msra.mxu0 %v268
    %622 = vmatpush.bf16.msra.mxu0 %v267
    %623 = vmatpush.bf16.msra.mxu0 %v266
    %624 = vmatpush.bf16.msra.mxu0 %v265
    %625 = vmatpush.bf16.msra.mxu0 %v264
    %626 = vmatpush.bf16.msra.mxu0 %v263
    %627 = vmatmul.bf16.gmra.mxu0 %v618
    %v628 = vpop.f32.mrf.mxu0
    %v629 = vadd.f32 0.0, %v628
    %v630 = vpop.f32.mrf.mxu0
    %631 = vdwg.mxu0
    %632 = vmatpush.bf16.msra.mxu0 %v270
    %633 = vmatpush.bf16.msra.mxu0 %v269
    %634 = vmatpush.bf16.msra.mxu0 %v268
    %635 = vmatpush.bf16.msra.mxu0 %v267
    %636 = vmatpush.bf16.msra.mxu0 %v266
    %637 = vmatpush.bf16.msra.mxu0 %v265
    %638 = vmatpush.bf16.msra.mxu0 %v264
    %639 = vmatpush.bf16.msra.mxu0 %v263
    %640 = vmatmul.bf16.gmra.mxu0 %v615
    %v641 = vpop.f32.mrf.mxu0
    %v642 = vadd.f32 %v629, %v641
    %v643 = vpop.f32.mrf.mxu0
    %644 = vdwg.mxu0
    %v645 = vsub.f32 %v612, %v642
    %v646 = vmul.f32 %v645, %v645
    %v647 = vpack.c.bf16 %v646, %v646
    %v648 = vunpack.c.l.bf16 %v647
    %v649 = vsub.f32 %v646, %v648
    %v650 = vpack.c.bf16 %v649, %v649
    %651 = vmatpush.bf16.msra.mxu0 %v270
    %652 = vmatpush.bf16.msra.mxu0 %v269
    %653 = vmatpush.bf16.msra.mxu0 %v268
    %654 = vmatpush.bf16.msra.mxu0 %v267
    %655 = vmatpush.bf16.msra.mxu0 %v266
    %656 = vmatpush.bf16.msra.mxu0 %v265
    %657 = vmatpush.bf16.msra.mxu0 %v264
    %658 = vmatpush.bf16.msra.mxu0 %v263
    %659 = vmatmul.bf16.gmra.mxu0 %v650
    %v660 = vpop.f32.mrf.mxu0
    %v661 = vadd.f32 0.0, %v660
    %v662 = vpop.f32.mrf.mxu0
    %663 = vdwg.mxu0
    %664 = vmatpush.bf16.msra.mxu0 %v270
    %665 = vmatpush.bf16.msra.mxu0 %v269
    %666 = vmatpush.bf16.msra.mxu0 %v268
    %667 = vmatpush.bf16.msra.mxu0 %v267
    %668 = vmatpush.bf16.msra.mxu0 %v266
    %669 = vmatpush.bf16.msra.mxu0 %v265
    %670 = vmatpush.bf16.msra.mxu0 %v264
    %671 = vmatpush.bf16.msra.mxu0 %v263
    %672 = vmatmul.bf16.gmra.mxu0 %v647
    %v673 = vpop.f32.mrf.mxu0
    %v674 = vadd.f32 %v661, %v673
    %v675 = vpop.f32.mrf.mxu0
    %676 = vdwg.mxu0
    %v677 = vadd.f32 %v674, 1e-05
    %v678 = vrsqrt.pop %v677
    %v679 = vmul.f32 %v678, %v677
    %v680 = vmul.f32 %v679, %v678
    %v681 = vmul.f32 0.5, %v680
    %v682 = vsub.f32 1.5, %v681
    %v683 = vmul.f32 %v678, %v682
    %vm684 = vweird.f32 %v677
    %vm685 = vweird.f32 %v678
    %vm686 = vmor %vm684, %vm685
    %v687 = vsel %vm686, %v678, %v683
    %v688 = vmul.f32 %v645, %v687
    %v690 = vperm.slane %v613, 0
    %v692 = vmul.f32 %v688, %v690
    %v694 = vperm.slane %v614, 0
    %v696 = vadd.f32 %v692, %v694
    %697 = vst [vmem:[#allocation2] sm:$0xff] %v696
    // Predicated region
    $region38: #{res_dnn_forward.1} parent=1 // pred_check
      _
    $region39: #{res_dnn_forward.1} parent=1 // pred_check_branch
      %699 = sbr.rel (0) target = $region41
    $region40: #{res_dnn_forward.1} parent=1 // pred_region
      // Predicated region
      $region42: #{res_dnn_forward.1} parent=40 // pred_check
        _
      $region43: #{res_dnn_forward.1} parent=40 // pred_check_branch
        %701 = sbr.rel (0) target = $region45
      $region44: #{res_dnn_forward.1} parent=40 // pred_region
        // Predicated region
        $region46: #{res_dnn_forward.1} parent=44 // pred_check
          _
        $region47: #{res_dnn_forward.1} parent=44 // pred_check_branch
          %703 = sbr.rel target = $region49
        $region48: #{res_dnn_forward.1} parent=44 // pred_region
          // Predicated region
          $region61: #{res_dnn_forward.1} parent=48 // pred_check
            _
          $region62: #{res_dnn_forward.1} parent=48 // pred_check_branch
            %719 = sbr.rel (0) target = $region64
          $region63: #{res_dnn_forward.1} parent=48 // pred_region
            %s721 = ssub.s32 16, 1
            loop: start=0, step=1, limit=1
            $region65: #{res_dnn_forward.1} parent=63 // loop_pre_header
              _
            $region66: #{res_dnn_forward.1} parent=63 // loop_header
              %s723 = sphi 0, %s727
              %p724 = scmp.ge.s32.totalorder %s723, 1
              %s728 = sphi [#allocation2], [#allocation2]
              %s729 = sphi %s9, %s9
            $region67: #{res_dnn_forward.1} parent=63 // loop_header_branch
              %726 = sbr.rel (%p724) target = $region71
            $region68: #{res_dnn_forward.1} parent=63 // loop_body
              %v730 = vld [vmem:[%s728] sm:%s721]
              %731 = vst [vmem:[%s729] sm:%s721] %v730
            $region69: #{res_dnn_forward.1} parent=63 // loop_footer
              %s727 = sadd.s32 1, %s723
            $region70: #{res_dnn_forward.1} parent=63 // loop_footer_branch
              %722 = sbr.rel target = $region66
            $region71: #{res_dnn_forward.1} parent=63 // loop_exit
              _
          $region64: #{res_dnn_forward.1} parent=48 // pred_fallthru
            _
        $region49: #{res_dnn_forward.1} parent=44 // pred_fallthru
          _
        // Predicated region
        $region50: #{res_dnn_forward.1} parent=44 // pred_check
          _
        $region51: #{res_dnn_forward.1} parent=44 // pred_check_branch
          %705 = sbr.rel (0) target = $region53
        $region52: #{res_dnn_forward.1} parent=44 // pred_region
          %s707 = ssub.s32 16, 1
          loop: start=0, step=1, limit=1
          $region54: #{res_dnn_forward.1} parent=52 // loop_pre_header
            _
          $region55: #{res_dnn_forward.1} parent=52 // loop_header
            %s709 = sphi 0, %s713
            %p710 = scmp.ge.s32.totalorder %s709, 1
            %s714 = sphi [#allocation2], [#allocation2]
            %s715 = sphi %s9, %s9
          $region56: #{res_dnn_forward.1} parent=52 // loop_header_branch
            %712 = sbr.rel (%p710) target = $region60
          $region57: #{res_dnn_forward.1} parent=52 // loop_body
            %v716 = vld [vmem:[%s714] sm:%s707]
            %717 = vst [vmem:[%s715] sm:%s707] %v716
          $region58: #{res_dnn_forward.1} parent=52 // loop_footer
            %s713 = sadd.s32 1, %s709
          $region59: #{res_dnn_forward.1} parent=52 // loop_footer_branch
            %708 = sbr.rel target = $region55
          $region60: #{res_dnn_forward.1} parent=52 // loop_exit
            _
        $region53: #{res_dnn_forward.1} parent=44 // pred_fallthru
          _
      $region45: #{res_dnn_forward.1} parent=40 // pred_fallthru
        _
      %732 = vnop
    $region41: #{res_dnn_forward.1} parent=1 // pred_fallthru
      _
    // Predicated region
    $region72: #{res_dnn_forward.1} parent=1 // pred_check
      _
    $region73: #{res_dnn_forward.1} parent=1 // pred_check_branch
      %734 = sbr.rel (0) target = $region75
    $region74: #{res_dnn_forward.1} parent=1 // pred_region
      _
    $region75: #{res_dnn_forward.1} parent=1 // pred_fallthru
      _

</llo_original>
